<compile_context>
chip_gen: v7x
topology: tpu7x:2x2x1
jax: 0.10.0
libtpu: 0.0.40
codegen_flags: <defaults>
</compile_context>

<pallas_src>
import functools

import jax
import jax.numpy as jnp
from jax.experimental import pallas as pl
from jax.experimental.pallas import tpu as pltpu


def _round_up(x, m):
    return ((x + m - 1) // m) * m


def _linear_kernel(x_ref, w_ref, b_ref, o_ref, *, use_bf16):
    x = x_ref[...]
    w = w_ref[...]
    if use_bf16:
        # bf16 operands feed the MXU natively on v6e/v7x; accumulate in f32.
        acc = jnp.dot(x.astype(jnp.bfloat16), w.astype(jnp.bfloat16),
                      preferred_element_type=jnp.float32)
    else:
        # Full-precision f32 path (multi-pass MXU) for tight numerical parity.
        acc = jnp.dot(x, w, preferred_element_type=jnp.float32,
                      precision=jax.lax.Precision.HIGHEST)
    o_ref[...] = (acc + b_ref[...]).astype(o_ref.dtype)


def _pick_batch_tile(block_b, in_dim, out_p, itemsize=4,
                     vmem_budget=24 << 20):
    """Shrink the batch tile until the double-buffered working set fits."""
    tm = max(8, _round_up(min(block_b, 512), 8))
    while tm > 8:
        working = (2 * tm * in_dim * itemsize      # x tiles (double-buffered)
                   + 2 * tm * out_p * itemsize     # out tiles
                   + 2 * in_dim * out_p * itemsize # resident weight (x2 bufs)
                   + 2 * out_p * itemsize)         # resident bias
        if working <= vmem_budget:
            break
        tm //= 2
    return tm


def mdn_classification_head(x, weight_t, bias, *, block_b=512, use_bf16=True):
    """y = x @ weight_t + bias computed in a Pallas TPU kernel.

    x:        (..., in_dim)       float32
    weight_t: (in_dim, out_dim)   float32  (PyTorch weight transposed)
    bias:     (out_dim,)          float32
    returns:  (..., out_dim)      float32
    """
    orig_shape = x.shape
    in_dim, out_dim = weight_t.shape
    x2d = x.reshape(-1, in_dim)
    B = x2d.shape[0]

    # ---- lane-dense output: zero-pad out_dim to a multiple of 128 ----------
    out_p = _round_up(out_dim, 128)
    if out_p != out_dim:
        weight_t = jnp.pad(weight_t, ((0, 0), (0, out_p - out_dim)))
        bias = jnp.pad(bias, (0, out_p - out_dim))
    bias2d = bias.reshape(1, out_p)

    # ---- tile the batch axis; weight/bias stay resident across the grid ----
    tm = _pick_batch_tile(block_b, in_dim, out_p)
    if B <= tm:
        tm = B                       # single full-extent block (always legal)
        B_p = B
    else:
        B_p = _round_up(B, tm)       # pad so every tile is full; sliced below
    if B_p != B:
        x2d = jnp.pad(x2d, ((0, B_p - B), (0, 0)))

    grid = (B_p // tm,)

    out = pl.pallas_call(
        functools.partial(_linear_kernel, use_bf16=use_bf16),
        out_shape=jax.ShapeDtypeStruct((B_p, out_p), x2d.dtype),
        grid_spec=pl.GridSpec(
            grid=grid,
            in_specs=[
                pl.BlockSpec((tm, in_dim), lambda i: (i, 0)),     # x batch tile
                pl.BlockSpec((in_dim, out_p), lambda i: (0, 0)),  # resident W
                pl.BlockSpec((1, out_p), lambda i: (0, 0)),       # resident bias
            ],
            out_specs=pl.BlockSpec((tm, out_p), lambda i: (i, 0)),
        ),
        compiler_params=pltpu.CompilerParams(
            # Batch tiles are independent -> shardable across v7x's 2 TCs.
            dimension_semantics=("parallel",),
        ),
    )(x2d, weight_t, bias2d)

    # Slice away batch/out padding and restore leading dims.
    out = out[:B, :out_dim]
    return out.reshape(*orig_shape[:-1], out_dim)


if __name__ == "__main__":
    # Small shapes consistent with a Linear(in_dim, out_dim) head.
    B, IN_DIM, OUT_DIM = 8, 32, 16

    key = jax.random.PRNGKey(0)
    k_x, k_w, k_b = jax.random.split(key, 3)

    # Deterministic init mimicking nn.Linear's U(-1/sqrt(in_dim), 1/sqrt(in_dim)).
    bound = 1.0 / (IN_DIM ** 0.5)
    weight = jax.random.uniform(k_w, (OUT_DIM, IN_DIM), jnp.float32, -bound, bound)
    bias = jax.random.uniform(k_b, (OUT_DIM,), jnp.float32, -bound, bound)
    weight_t = weight.T  # (IN_DIM, OUT_DIM)

    x = jax.random.normal(k_x, (B, IN_DIM), jnp.float32)

    # Full-precision reference.
    y_ref = jnp.dot(x, weight_t, precision=jax.lax.Precision.HIGHEST) + bias

    # Fast bf16-operand MXU path (default).
    y_bf16 = jax.block_until_ready(
        mdn_classification_head(x, weight_t, bias, use_bf16=True))
    assert y_bf16.shape == (B, OUT_DIM)
    assert jnp.allclose(y_bf16, y_ref, atol=2e-2, rtol=2e-2)

    # f32 HIGHEST-precision path for tight numerical parity.
    y_f32 = jax.block_until_ready(
        mdn_classification_head(x, weight_t, bias, use_bf16=False))
    assert y_f32.shape == (B, OUT_DIM)
    assert jnp.allclose(y_f32, y_ref, atol=1e-5, rtol=1e-5)

    print("KERNEL_OK")
</pallas_src>

<mosaic_0001>
module attributes {stable_mosaic.version = 11 : i64} {
  func.func @_linear_kernel(%arg0: i32, %arg1: memref<8x32xf32, #tpu.memory_space<vmem>>, %arg2: memref<32x128xf32, #tpu.memory_space<vmem>>, %arg3: memref<1x128xf32, #tpu.memory_space<vmem>>, %arg4: memref<8x128xf32, #tpu.memory_space<vmem>>) attributes {dimension_semantics = [#tpu.dimension_semantics<parallel>], iteration_bounds = array<i64: 1>, scalar_prefetch = 0 : i64, scratch_operands = 0 : i64, tpu.core_type = #tpu.core_type<tc>, window_params = [{transform_indices = @transform_0, window_bounds = array<i64: 8, 32>}, {pipeline_mode = #tpu.pipeline_mode<synchronous>, transform_indices = @transform_1, window_bounds = array<i64: 32, 128>}, {pipeline_mode = #tpu.pipeline_mode<synchronous>, transform_indices = @transform_2, window_bounds = array<i64: 1, 128>}, {transform_indices = @transform_3, window_bounds = array<i64: 8, 128>}]} {
    %c0 = arith.constant 0 : index
    %c0_0 = arith.constant 0 : index
    %0 = vector.load %arg1[%c0, %c0_0] : memref<8x32xf32, #tpu.memory_space<vmem>>, vector<8x32xf32>
    %c0_1 = arith.constant 0 : index
    %c0_2 = arith.constant 0 : index
    %1 = vector.load %arg2[%c0_1, %c0_2] : memref<32x128xf32, #tpu.memory_space<vmem>>, vector<32x128xf32>
    %2 = arith.truncf %0 : vector<8x32xf32> to vector<8x32xbf16>
    %3 = arith.truncf %1 : vector<32x128xf32> to vector<32x128xbf16>
    %cst = arith.constant dense<0.000000e+00> : vector<8x128xf32>
    %4 = tpu.matmul %2, %3, %cst {dimension_numbers = #tpu.dot_dimension_numbers<[1], [0], [0], [1], [0, 0, 1, 1], [], []>} : vector<8x32xbf16>, vector<32x128xbf16>, vector<8x128xf32> -> vector<8x128xf32>
    %c0_3 = arith.constant 0 : index
    %c0_4 = arith.constant 0 : index
    %5 = vector.load %arg3[%c0_3, %c0_4] : memref<1x128xf32, #tpu.memory_space<vmem>>, vector<1x128xf32>
    %6 = vector.broadcast %5 : vector<1x128xf32> to vector<8x128xf32>
    %7 = arith.addf %4, %6 : vector<8x128xf32>
    %c0_5 = arith.constant 0 : index
    %c0_6 = arith.constant 0 : index
    %8 = vector.load %arg4[%c0_5, %c0_6] : memref<8x128xf32, #tpu.memory_space<vmem>>, vector<8x128xf32>
    tpu.vector_store %arg4[%c0_5, %c0_6], %7 {strides = array<i32>} : memref<8x128xf32, #tpu.memory_space<vmem>>, vector<8x128xf32>,
    return
  }
  func.func @transform_0(%arg0: i32) -> (i32, i32) {
    %c0_i32 = arith.constant 0 : i32
    %c0_i32_0 = arith.constant 0 : i32
    return %arg0, %c0_i32 : i32, i32
  }
  func.func @transform_1(%arg0: i32) -> (i32, i32) {
    %c0_i32 = arith.constant 0 : i32
    %c0_i32_0 = arith.constant 0 : i32
    %c0_i32_1 = arith.constant 0 : i32
    return %c0_i32, %c0_i32_0 : i32, i32
  }
  func.func @transform_2(%arg0: i32) -> (i32, i32) {
    %c0_i32 = arith.constant 0 : i32
    %c0_i32_0 = arith.constant 0 : i32
    %c0_i32_1 = arith.constant 0 : i32
    return %c0_i32, %c0_i32_0 : i32, i32
  }
  func.func @transform_3(%arg0: i32) -> (i32, i32) {
    %c0_i32 = arith.constant 0 : i32
    %c0_i32_0 = arith.constant 0 : i32
    return %arg0, %c0_i32 : i32, i32
  }
}

</mosaic_0001>

<llo_original>
// kernel: tpu_custom_call.1
$region0: #{tpu_custom_call.1}
  #allocation0 [shape = 'u32[]', space=smem, size = 0x4, offset = 0x4, fixed_abs, tag = 'smem constant byte address 0x4 - core index']
  #allocation1 [shape = 'u32[144,128]{1,0:T(1,128)}', space=vmem, size = 0x12000, scoped, tag = 'internal scratch']
  %s0 = inlined_call_operand.hbm [shape: f32[8,32], index: 0, kind: input, shape index: {}]
  %s1 = inlined_call_operand.hbm [shape: f32[32,128], index: 1, kind: input, shape index: {}]
  %s2 = inlined_call_operand.vmem [shape: f32[1,128], index: 2, kind: input, shape index: {}]
  %s3 = inlined_call_operand.hbm [shape: f32[8,128], index: 3, kind: output, shape index: {}]
  %s4 = sld [smem:[#allocation0]]
  $region30: #{tpu_custom_call.1} parent=0
    _
  %s6 = ssub.s32 1, %s4
  %s7 = scalar_select 0, %s6, %s4
  $region1: #{tpu_custom_call.1} parent=0
    #allocation2 [shape = 'u8[4096]{0}', space=vmem, size = 0x1000, scoped, tag = 'input window, operand 0, single buffered']
    #allocation3 [shape = 's32[1]{0}', space=sflag, size = 0x4, scoped, tag = 'scoped memory for tpu_custom_call.1']
    #allocation4 [shape = 's32[1]{0}', space=sflag, size = 0x4, scoped, tag = 'scoped memory for tpu_custom_call.1']
    #allocation5 [shape = 'u8[16384]{0}', space=vmem, size = 0x4000, scoped, tag = 'input window, operand 1, single buffered']
    #allocation6 [shape = 's32[1]{0}', space=sflag, size = 0x4, scoped, tag = 'scoped memory for tpu_custom_call.1']
    #allocation7 [shape = 'u8[4096]{0}', space=vmem, size = 0x1000, scoped, tag = 'output window, operand 0, single buffered']
    %8 = vsyncpa [#allocation3], 0
    %9 = vsyncpa [#allocation6], 0
    %10 = vsyncpa [#allocation4], 0
    // Predicated region
    $region2: #{tpu_custom_call.1} parent=1 // pred_check
      _
    $region3: #{tpu_custom_call.1} parent=1 // pred_check_branch
      %12 = sbr.rel (0) target = $region5
    $region4: #{tpu_custom_call.1} parent=1 // pred_region
      %s14 = ssub.s32 128, 128
      %15 = vsyncadd [#allocation3], %s14
      %s17 = sshll.u32 [#allocation2], 4
      %s18 = int_to_ptr.vmem [resolvable:$true] %s17
      %20 = dma.hbm_to_vmem [thread:$0]  %s0, 128, %s18, [#allocation3]
    $region5: #{tpu_custom_call.1} parent=1 // pred_fallthru
      _
    // Predicated region
    $region6: #{tpu_custom_call.1} parent=1 // pred_check
      _
    $region7: #{tpu_custom_call.1} parent=1 // pred_check_branch
      %22 = sbr.rel (0) target = $region9
    $region8: #{tpu_custom_call.1} parent=1 // pred_region
      %s24 = ssub.s32 512, 512
      %25 = vsyncadd [#allocation6], %s24
      %s26 = sshll.u32 [#allocation5], 4
      %s27 = int_to_ptr.vmem [resolvable:$true] %s26
      %32 = dma.hbm_to_vmem [thread:$0]  %s1, 512, %s27, [#allocation6], 128, 128, 8
    $region9: #{tpu_custom_call.1} parent=1 // pred_fallthru
      _
    // Predicated region
    $region10: #{tpu_custom_call.1} parent=1 // pred_check
      _
    $region11: #{tpu_custom_call.1} parent=1 // pred_check_branch
      %34 = sbr.rel (0) target = $region13
    $region12: #{tpu_custom_call.1} parent=1 // pred_region
      _
    $region13: #{tpu_custom_call.1} parent=1 // pred_fallthru
      _
    // Predicated region
    $region14: #{tpu_custom_call.1} parent=1 // pred_check
      _
    $region15: #{tpu_custom_call.1} parent=1 // pred_check_branch
      %36 = sbr.rel (0) target = $region17
    $region16: #{tpu_custom_call.1} parent=1 // pred_region
      %37 = dma.done [#allocation3], 128
    $region17: #{tpu_custom_call.1} parent=1 // pred_fallthru
      _
    // Predicated region
    $region18: #{tpu_custom_call.1} parent=1 // pred_check
      _
    $region19: #{tpu_custom_call.1} parent=1 // pred_check_branch
      %39 = sbr.rel (0) target = $region21
    $region20: #{tpu_custom_call.1} parent=1 // pred_region
      %40 = dma.done [#allocation6], 512
    $region21: #{tpu_custom_call.1} parent=1 // pred_fallthru
      _
    %v42 = vld [vmem:[#allocation2] sm:$0xff]
    %v43 = vld [vmem:[#allocation5] sm:$0xff]
    %v44 = vld [vmem:[#allocation5 + $0x8] sm:$0xff]
    %v45 = vld [vmem:[#allocation5 + $0x10] sm:$0xff]
    %v46 = vld [vmem:[#allocation5 + $0x18] sm:$0xff]
    %v47 = vpack.c.bf16 %v42, %v42
    %v48 = vpack.c.bf16 %v44, %v43
    %v49 = vpack.c.bf16 %v46, %v45
    %v50 = vld [vmem:[%s2] sm:$0x1]
    %v52 = vlaneseq
    %v53 = vshrl.u32 %v52, 7
    %v54 = vsub.s32 0, %v53
    %v55 = vrot.slane %v50, %v54
    %vm57 = vcmask 261120
    %v59 = vsel %vm57, %v47, 0
    %61 = vmatprep.subr.bf16.mxu0 0
    %62 = vmatpush1.bf16.msra.mxu0 %v48
    %63 = vmatprep.subr.bf16.mxu0 0
    %64 = vmatpush1.bf16.msra.mxu0 %v49
    %65 = vmatprep.subr.bf16.mxu0 0
    %66 = vmatpush1.bf16.msra.mxu0 0
    %67 = vmatprep.subr.bf16.mxu0 0
    %68 = vmatpush1.bf16.msra.mxu0 0
    %69 = vmatprep.subr.bf16.mxu0 0
    %70 = vmatpush1.bf16.msra.mxu0 0
    %71 = vmatprep.subr.bf16.mxu0 0
    %72 = vmatpush1.bf16.msra.mxu0 0
    %73 = vmatprep.subr.bf16.mxu0 0
    %74 = vmatpush1.bf16.msra.mxu0 0
    %75 = vmatprep.subr.bf16.mxu0 0
    %76 = vmatpush1.bf16.msra.mxu0 0
    %77 = vmatprep.subr.bf16.mxu0 0
    %78 = vmatpush1.bf16.msra.mxu0 0
    %79 = vmatprep.subr.bf16.mxu0 0
    %80 = vmatpush1.bf16.msra.mxu0 0
    %81 = vmatprep.subr.bf16.mxu0 0
    %82 = vmatpush1.bf16.msra.mxu0 0
    %83 = vmatprep.subr.bf16.mxu0 0
    %84 = vmatpush1.bf16.msra.mxu0 0
    %85 = vmatprep.subr.bf16.mxu0 0
    %86 = vmatpush1.bf16.msra.mxu0 0
    %87 = vmatprep.subr.bf16.mxu0 0
    %88 = vmatpush1.bf16.msra.mxu0 0
    %89 = vmatprep.subr.bf16.mxu0 0
    %90 = vmatpush1.bf16.msra.mxu0 0
    %91 = vmatprep.subr.bf16.mxu0 0
    %92 = vmatpush1.bf16.msra.mxu0 0
    %93 = vmatprep.mubr.bf16.mxu0 0
    %94 = vmatmul.mubr.bf16.gmra.mrb[0].mxu0 %v59
    %v95 = vpop.f32.mrb[0].mxu0
    %v96 = vadd.f32 %v55, %v95
    %v97 = vpop.f32.mrb[0].mxu0
    %v98 = vpop.f32.mrb[0].mxu0
    %v99 = vpop.f32.mrb[0].mxu0
    %100 = vdwg.mxu0
    %101 = vst [vmem:[#allocation7] sm:$0xff] %v96
    // Predicated region
    $region22: #{tpu_custom_call.1} parent=1 // pred_check
      _
    $region23: #{tpu_custom_call.1} parent=1 // pred_check_branch
      %103 = sbr.rel (0) target = $region25
    $region24: #{tpu_custom_call.1} parent=1 // pred_region
      %s105 = ssub.s32 128, 128
      %106 = vsyncadd [#allocation4], %s105
      %s108 = sshll.u32 [#allocation7], 4
      %s109 = int_to_ptr.vmem [resolvable:$true] %s108
      %111 = dma.vmem_to_hbm [thread:$0]  %s109, 128, %s3, [#allocation4]
    $region25: #{tpu_custom_call.1} parent=1 // pred_fallthru
      _
    // Predicated region
    $region26: #{tpu_custom_call.1} parent=1 // pred_check
      _
    $region27: #{tpu_custom_call.1} parent=1 // pred_check_branch
      %113 = sbr.rel (0) target = $region29
    $region28: #{tpu_custom_call.1} parent=1 // pred_region
      %114 = dma.done [#allocation4], 128
    $region29: #{tpu_custom_call.1} parent=1 // pred_fallthru
      _
    %115 = vsyncpa [#allocation3], 1
    %116 = vsyncpa [#allocation6], 1
    %117 = vsyncpa [#allocation4], 1

</llo_original>
